<compile_context>
chip_gen: v7x
topology: tpu7x:2x2x1
jax: 0.10.0
libtpu: 0.0.40
codegen_flags: <defaults>
</compile_context>

<pallas_src>
import jax
import jax.numpy as jnp
from jax.experimental import pallas as pl
from jax.experimental.pallas import tpu as pltpu


# ---------------------------------------------------------------------------
# Fused kernel: conv-as-matmul (3 branches folded) + BN stats + BN + ReLU
# ---------------------------------------------------------------------------
def _make_fused_kernel(N, C3, HW, eps):
    def kernel(p_ref, w_ref, g_ref, b_ref, o_ref, conv_ref):
        # p_ref   : (N, K, HW)   im2col slabs, HW lane-dense
        # w_ref   : (C3, K)      folded + pre-transposed weights of all 3 branches
        # g_ref   : (C3, 1)      BatchNorm gamma
        # b_ref   : (C3, 1)      BatchNorm beta
        # o_ref   : (N, C3, HW)  output (already NCHW after a free reshape)
        # conv_ref: (N, C3, HW)  VMEM scratch holding the conv output
        s = jnp.zeros((C3, 1), jnp.float32)
        ss = jnp.zeros((C3, 1), jnp.float32)

        # Phase 1: one MXU matmul per batch + BN statistics while resident.
        for n in range(N):                      # static unroll, N is tiny
            y = jnp.dot(w_ref[...], p_ref[n],
                        preferred_element_type=jnp.float32)        # (C3, HW)
            conv_ref[n] = y
            s = s + jnp.sum(y, axis=1, keepdims=True)
            ss = ss + jnp.sum(y * y, axis=1, keepdims=True)

        # Fold stats into scale/shift (biased variance, torch training mode).
        tot = jnp.float32(N * HW)
        mean = s / tot
        var = jnp.maximum(ss / tot - mean * mean, 0.0)
        inv = jax.lax.rsqrt(var + eps)
        scale = g_ref[...] * inv                                    # (C3, 1)
        shift = b_ref[...] - mean * scale                           # (C3, 1)

        # Phase 2: normalize + affine + ReLU; lane-dense stores (HW = 256).
        for n in range(N):
            o_ref[n] = jnp.maximum(conv_ref[n] * scale + shift, 0.0)

    return kernel


# ---------------------------------------------------------------------------
# Wrapper: PyTorch-equivalent forward (NCHW in, NCHW out)
# ---------------------------------------------------------------------------
def bn_inception_forward(x_nchw, params, eps=1e-5):
    w0, w1, w2, bias, gamma, beta = params
    del bias  # conv biases cancel exactly inside train-mode BatchNorm
    N, Cin, H, W = x_nchw.shape
    Cout = w0.shape[-1]
    C3 = 3 * Cout
    HW = H * W
    K = 25 * Cin

    # ---- trace-time param prep: one zero-padded, pre-transposed weight -----
    # Shared pad-2 frame: 1x1 (pad 0) -> tap (2,2); 3x3 (pad 1) -> taps
    # (kh+1, kw+1); 5x5 (pad 2) -> every tap.
    w_all = jnp.zeros((25, Cin, C3), jnp.float32)
    w_all = w_all.at[2 * 5 + 2, :, 0:Cout].set(w0)
    for kh in range(3):
        for kw in range(3):
            w_all = w_all.at[(kh + 1) * 5 + (kw + 1), :, Cout:2 * Cout].set(
                w1[kh * 3 + kw])
    w_all = w_all.at[:, :, 2 * Cout:3 * Cout].set(w2)
    w_t = w_all.reshape(K, C3).T                 # (C3, K); patch row = tap*Cin + cin

    # ---- trace-time im2col: 25 shifted copies of the pad-2 input -----------
    xp = jnp.pad(x_nchw.astype(jnp.float32), ((0, 0), (0, 0), (2, 2), (2, 2)))
    slabs = [xp[:, :, kh:kh + H, kw:kw + W].reshape(N, Cin, HW)
             for kh in range(5) for kw in range(5)]
    patches = jnp.concatenate(slabs, axis=1)     # (N, K, HW), row = tap*Cin + cin

    g = gamma.reshape(C3, 1).astype(jnp.float32)
    b = beta.reshape(C3, 1).astype(jnp.float32)

    y = pl.pallas_call(
        _make_fused_kernel(N, C3, HW, eps),
        out_shape=jax.ShapeDtypeStruct((N, C3, HW), jnp.float32),
        grid=(1,),
        in_specs=[
            pl.BlockSpec((N, K, HW), lambda i: (0, 0, 0)),
            pl.BlockSpec((C3, K), lambda i: (0, 0)),
            pl.BlockSpec((C3, 1), lambda i: (0, 0)),
            pl.BlockSpec((C3, 1), lambda i: (0, 0)),
        ],
        out_specs=pl.BlockSpec((N, C3, HW), lambda i: (0, 0, 0)),
        scratch_shapes=[pltpu.VMEM((N, C3, HW), jnp.float32)],
        compiler_params=pltpu.CompilerParams(
            dimension_semantics=("arbitrary",)),
    )(patches, w_t, g, b)

    # (N, C3, H*W) -> (N, C3, H, W): contiguous reshape, no transpose needed.
    return y.reshape(N, C3, H, W)


# ---------------------------------------------------------------------------
# Pure-JAX reference (keeps conv biases; validates the bias-cancellation too)
# ---------------------------------------------------------------------------
def bn_inception_reference(x_nchw, params, eps=1e-5):
    w0, w1, w2, bias, gamma, beta = params
    N, Cin, H, W = x_nchw.shape
    Cout = w0.shape[-1]
    x = jnp.transpose(x_nchw, (0, 2, 3, 1)).astype(jnp.float32)

    def conv(x, w_hwio, b, pad):
        y = jax.lax.conv_general_dilated(
            x, w_hwio, (1, 1), [(pad, pad), (pad, pad)],
            dimension_numbers=('NHWC', 'HWIO', 'NHWC'))
        return y + b

    y0 = conv(x, w0.reshape(1, 1, Cin, Cout), bias[0], 0)
    y1 = conv(x, w1.reshape(3, 3, Cin, Cout), bias[1], 1)
    y2 = conv(x, w2.reshape(5, 5, Cin, Cout), bias[2], 2)
    y = jnp.concatenate([y0, y1, y2], axis=-1)
    mean = jnp.mean(y, axis=(0, 1, 2), keepdims=True)
    var = jnp.mean((y - mean) ** 2, axis=(0, 1, 2), keepdims=True)
    y = (y - mean) * jax.lax.rsqrt(var + eps) * gamma.reshape(1, 1, 1, -1) \
        + beta.reshape(1, 1, 1, -1)
    y = jnp.maximum(y, 0.0)
    return jnp.transpose(y, (0, 3, 1, 2))


if __name__ == "__main__":
    # Small shapes consistent with the module: NCHW input, 3 branches of Cout each.
    N, Cin, H, W = 2, 4, 16, 16
    Cout = 8  # src_output_dims

    key = jax.random.PRNGKey(0)
    k0, k1, k2, k3, k4, k5, kx = jax.random.split(key, 7)

    # Conv weights stored as (kh*kw, Cin, Cout); PyTorch layout would be
    # (Cout, Cin, kh, kw) — synthetic deterministic init, so generated directly.
    # TODO(synk): any path loading real checkpoints must transpose from PyTorch layout.
    w0 = jax.random.normal(k0, (Cin, Cout), jnp.float32) * 0.1
    w1 = jax.random.normal(k1, (9, Cin, Cout), jnp.float32) * 0.1
    w2 = jax.random.normal(k2, (25, Cin, Cout), jnp.float32) * 0.1
    bias = jax.random.normal(k3, (3, Cout), jnp.float32) * 0.1
    gamma = 1.0 + 0.1 * jax.random.normal(k4, (1, 3 * Cout), jnp.float32)
    beta = 0.1 * jax.random.normal(k5, (1, 3 * Cout), jnp.float32)
    params = (w0, w1, w2, bias, gamma, beta)

    x = jax.random.normal(kx, (N, Cin, H, W), jnp.float32)

    out = jax.block_until_ready(bn_inception_forward(x, params))
    ref = jax.block_until_ready(bn_inception_reference(x, params))

    assert out.shape == (N, 3 * Cout, H, W), out.shape
    assert jnp.allclose(out, ref, atol=1e-4, rtol=1e-4), float(jnp.max(jnp.abs(out - ref)))
    print("KERNEL_OK")
</pallas_src>

<mosaic_0001>
module attributes {stable_mosaic.version = 11 : i64} {
  func.func @kernel(%arg0: i32, %arg1: memref<2x100x256xf32, #tpu.memory_space<vmem>>, %arg2: memref<24x100xf32, #tpu.memory_space<vmem>>, %arg3: memref<24x1xf32, #tpu.memory_space<vmem>>, %arg4: memref<24x1xf32, #tpu.memory_space<vmem>>, %arg5: memref<2x24x256xf32, #tpu.memory_space<vmem>>, %arg6: memref<2x24x256xf32, #tpu.memory_space<vmem>>) attributes {dimension_semantics = [#tpu.dimension_semantics<arbitrary>], iteration_bounds = array<i64: 1>, scalar_prefetch = 0 : i64, scratch_operands = 1 : i64, tpu.core_type = #tpu.core_type<tc>, window_params = [{pipeline_mode = #tpu.pipeline_mode<synchronous>, transform_indices = @transform_0, window_bounds = array<i64: 2, 100, 256>}, {pipeline_mode = #tpu.pipeline_mode<synchronous>, transform_indices = @transform_1, window_bounds = array<i64: 24, 100>}, {pipeline_mode = #tpu.pipeline_mode<synchronous>, transform_indices = @transform_2, window_bounds = array<i64: 24, 1>}, {pipeline_mode = #tpu.pipeline_mode<synchronous>, transform_indices = @transform_3, window_bounds = array<i64: 24, 1>}, {pipeline_mode = #tpu.pipeline_mode<synchronous>, transform_indices = @transform_4, window_bounds = array<i64: 2, 24, 256>}]} {
    %cst = arith.constant 0.000000e+00 : f32
    %0 = vector.broadcast %cst : f32 to vector<24x1xf32>
    %cst_0 = arith.constant 0.000000e+00 : f32
    %1 = vector.broadcast %cst_0 : f32 to vector<24x1xf32>
    %c0 = arith.constant 0 : index
    %c0_1 = arith.constant 0 : index
    %2 = vector.load %arg2[%c0, %c0_1] : memref<24x100xf32, #tpu.memory_space<vmem>>, vector<24x100xf32>
    %c0_2 = arith.constant 0 : index
    %c0_3 = arith.constant 0 : index
    %c0_4 = arith.constant 0 : index
    %3 = vector.load %arg1[%c0_2, %c0_3, %c0_4] : memref<2x100x256xf32, #tpu.memory_space<vmem>>, vector<1x100x256xf32>
    %4 = vector.shape_cast %3 : vector<1x100x256xf32> to vector<100x256xf32>
    %cst_5 = arith.constant dense<0.000000e+00> : vector<24x256xf32>
    %5 = tpu.matmul %2, %4, %cst_5 {dimension_numbers = #tpu.dot_dimension_numbers<[1], [0], [0], [1], [0, 0, 1, 1], [], []>} : vector<24x100xf32>, vector<100x256xf32>, vector<24x256xf32> -> vector<24x256xf32>
    %c0_6 = arith.constant 0 : index
    %c0_7 = arith.constant 0 : index
    %c0_8 = arith.constant 0 : index
    %6 = vector.load %arg6[%c0_6, %c0_7, %c0_8] : memref<2x24x256xf32, #tpu.memory_space<vmem>>, vector<1x24x256xf32>
    %7 = vector.shape_cast %6 : vector<1x24x256xf32> to vector<24x256xf32>
    %8 = vector.shape_cast %5 : vector<24x256xf32> to vector<1x24x256xf32>
    tpu.vector_store %arg6[%c0_6, %c0_7, %c0_8], %8 {strides = array<i32>} : memref<2x24x256xf32, #tpu.memory_space<vmem>>, vector<1x24x256xf32>,
    %cst_9 = arith.constant dense<0.000000e+00> : vector<24xf32>
    %9 = vector.multi_reduction <add>, %5, %cst_9 [1] : vector<24x256xf32> to vector<24xf32>
    %10 = vector.shape_cast %9 : vector<24xf32> to vector<24x1xf32>
    %11 = arith.addf %0, %10 : vector<24x1xf32>
    %12 = arith.mulf %5, %5 : vector<24x256xf32>
    %cst_10 = arith.constant dense<0.000000e+00> : vector<24xf32>
    %13 = vector.multi_reduction <add>, %12, %cst_10 [1] : vector<24x256xf32> to vector<24xf32>
    %14 = vector.shape_cast %13 : vector<24xf32> to vector<24x1xf32>
    %15 = arith.addf %1, %14 : vector<24x1xf32>
    %c0_11 = arith.constant 0 : index
    %c0_12 = arith.constant 0 : index
    %16 = vector.load %arg2[%c0_11, %c0_12] : memref<24x100xf32, #tpu.memory_space<vmem>>, vector<24x100xf32>
    %c1 = arith.constant 1 : index
    %c0_13 = arith.constant 0 : index
    %c0_14 = arith.constant 0 : index
    %17 = vector.load %arg1[%c1, %c0_13, %c0_14] : memref<2x100x256xf32, #tpu.memory_space<vmem>>, vector<1x100x256xf32>
    %18 = vector.shape_cast %17 : vector<1x100x256xf32> to vector<100x256xf32>
    %cst_15 = arith.constant dense<0.000000e+00> : vector<24x256xf32>
    %19 = tpu.matmul %16, %18, %cst_15 {dimension_numbers = #tpu.dot_dimension_numbers<[1], [0], [0], [1], [0, 0, 1, 1], [], []>} : vector<24x100xf32>, vector<100x256xf32>, vector<24x256xf32> -> vector<24x256xf32>
    %c1_16 = arith.constant 1 : index
    %c0_17 = arith.constant 0 : index
    %c0_18 = arith.constant 0 : index
    %20 = vector.load %arg6[%c1_16, %c0_17, %c0_18] : memref<2x24x256xf32, #tpu.memory_space<vmem>>, vector<1x24x256xf32>
    %21 = vector.shape_cast %20 : vector<1x24x256xf32> to vector<24x256xf32>
    %22 = vector.shape_cast %19 : vector<24x256xf32> to vector<1x24x256xf32>
    tpu.vector_store %arg6[%c1_16, %c0_17, %c0_18], %22 {strides = array<i32>} : memref<2x24x256xf32, #tpu.memory_space<vmem>>, vector<1x24x256xf32>,
    %cst_19 = arith.constant dense<0.000000e+00> : vector<24xf32>
    %23 = vector.multi_reduction <add>, %19, %cst_19 [1] : vector<24x256xf32> to vector<24xf32>
    %24 = vector.shape_cast %23 : vector<24xf32> to vector<24x1xf32>
    %25 = arith.addf %11, %24 : vector<24x1xf32>
    %26 = arith.mulf %19, %19 : vector<24x256xf32>
    %cst_20 = arith.constant dense<0.000000e+00> : vector<24xf32>
    %27 = vector.multi_reduction <add>, %26, %cst_20 [1] : vector<24x256xf32> to vector<24xf32>
    %28 = vector.shape_cast %27 : vector<24xf32> to vector<24x1xf32>
    %29 = arith.addf %15, %28 : vector<24x1xf32>
    %cst_21 = arith.constant 5.120000e+02 : f32
    %30 = vector.broadcast %cst_21 : f32 to vector<24x1xf32>
    %31 = arith.divf %25, %30 : vector<24x1xf32>
    %cst_22 = arith.constant 5.120000e+02 : f32
    %32 = vector.broadcast %cst_22 : f32 to vector<24x1xf32>
    %33 = arith.divf %29, %32 : vector<24x1xf32>
    %34 = arith.mulf %31, %31 : vector<24x1xf32>
    %35 = arith.subf %33, %34 : vector<24x1xf32>
    %cst_23 = arith.constant 0.000000e+00 : f32
    %36 = vector.broadcast %cst_23 : f32 to vector<24x1xf32>
    %37 = arith.maximumf %35, %36 : vector<24x1xf32>
    %cst_24 = arith.constant 9.99999974E-6 : f32
    %38 = vector.broadcast %cst_24 : f32 to vector<24x1xf32>
    %39 = arith.addf %37, %38 : vector<24x1xf32>
    %40 = math.rsqrt %39 : vector<24x1xf32>
    %c0_25 = arith.constant 0 : index
    %c0_26 = arith.constant 0 : index
    %41 = vector.load %arg3[%c0_25, %c0_26] : memref<24x1xf32, #tpu.memory_space<vmem>>, vector<24x1xf32>
    %42 = arith.mulf %41, %40 : vector<24x1xf32>
    %c0_27 = arith.constant 0 : index
    %c0_28 = arith.constant 0 : index
    %43 = vector.load %arg4[%c0_27, %c0_28] : memref<24x1xf32, #tpu.memory_space<vmem>>, vector<24x1xf32>
    %44 = arith.mulf %31, %42 : vector<24x1xf32>
    %45 = arith.subf %43, %44 : vector<24x1xf32>
    %c0_29 = arith.constant 0 : index
    %c0_30 = arith.constant 0 : index
    %c0_31 = arith.constant 0 : index
    %46 = vector.load %arg6[%c0_29, %c0_30, %c0_31] : memref<2x24x256xf32, #tpu.memory_space<vmem>>, vector<1x24x256xf32>
    %47 = vector.shape_cast %46 : vector<1x24x256xf32> to vector<24x256xf32>
    %48 = vector.broadcast %42 : vector<24x1xf32> to vector<24x256xf32>
    %49 = arith.mulf %47, %48 : vector<24x256xf32>
    %50 = vector.broadcast %45 : vector<24x1xf32> to vector<24x256xf32>
    %51 = arith.addf %49, %50 : vector<24x256xf32>
    %cst_32 = arith.constant 0.000000e+00 : f32
    %52 = vector.broadcast %cst_32 : f32 to vector<24x256xf32>
    %53 = arith.maximumf %51, %52 : vector<24x256xf32>
    %c0_33 = arith.constant 0 : index
    %c0_34 = arith.constant 0 : index
    %c0_35 = arith.constant 0 : index
    %54 = vector.load %arg5[%c0_33, %c0_34, %c0_35] : memref<2x24x256xf32, #tpu.memory_space<vmem>>, vector<1x24x256xf32>
    %55 = vector.shape_cast %54 : vector<1x24x256xf32> to vector<24x256xf32>
    %56 = vector.shape_cast %53 : vector<24x256xf32> to vector<1x24x256xf32>
    tpu.vector_store %arg5[%c0_33, %c0_34, %c0_35], %56 {strides = array<i32>} : memref<2x24x256xf32, #tpu.memory_space<vmem>>, vector<1x24x256xf32>,
    %c1_36 = arith.constant 1 : index
    %c0_37 = arith.constant 0 : index
    %c0_38 = arith.constant 0 : index
    %57 = vector.load %arg6[%c1_36, %c0_37, %c0_38] : memref<2x24x256xf32, #tpu.memory_space<vmem>>, vector<1x24x256xf32>
    %58 = vector.shape_cast %57 : vector<1x24x256xf32> to vector<24x256xf32>
    %59 = vector.broadcast %42 : vector<24x1xf32> to vector<24x256xf32>
    %60 = arith.mulf %58, %59 : vector<24x256xf32>
    %61 = vector.broadcast %45 : vector<24x1xf32> to vector<24x256xf32>
    %62 = arith.addf %60, %61 : vector<24x256xf32>
    %cst_39 = arith.constant 0.000000e+00 : f32
    %63 = vector.broadcast %cst_39 : f32 to vector<24x256xf32>
    %64 = arith.maximumf %62, %63 : vector<24x256xf32>
    %c1_40 = arith.constant 1 : index
    %c0_41 = arith.constant 0 : index
    %c0_42 = arith.constant 0 : index
    %65 = vector.load %arg5[%c1_40, %c0_41, %c0_42] : memref<2x24x256xf32, #tpu.memory_space<vmem>>, vector<1x24x256xf32>
    %66 = vector.shape_cast %65 : vector<1x24x256xf32> to vector<24x256xf32>
    %67 = vector.shape_cast %64 : vector<24x256xf32> to vector<1x24x256xf32>
    tpu.vector_store %arg5[%c1_40, %c0_41, %c0_42], %67 {strides = array<i32>} : memref<2x24x256xf32, #tpu.memory_space<vmem>>, vector<1x24x256xf32>,
    return
  }
  func.func @transform_0(%arg0: i32) -> (i32, i32, i32) {
    %c0_i32 = arith.constant 0 : i32
    %c0_i32_0 = arith.constant 0 : i32
    %c0_i32_1 = arith.constant 0 : i32
    %c0_i32_2 = arith.constant 0 : i32
    return %c0_i32, %c0_i32_0, %c0_i32_1 : i32, i32, i32
  }
  func.func @transform_1(%arg0: i32) -> (i32, i32) {
    %c0_i32 = arith.constant 0 : i32
    %c0_i32_0 = arith.constant 0 : i32
    %c0_i32_1 = arith.constant 0 : i32
    return %c0_i32, %c0_i32_0 : i32, i32
  }
  func.func @transform_2(%arg0: i32) -> (i32, i32) {
    %c0_i32 = arith.constant 0 : i32
    %c0_i32_0 = arith.constant 0 : i32
    %c0_i32_1 = arith.constant 0 : i32
    return %c0_i32, %c0_i32_0 : i32, i32
  }
  func.func @transform_3(%arg0: i32) -> (i32, i32) {
    %c0_i32 = arith.constant 0 : i32
    %c0_i32_0 = arith.constant 0 : i32
    %c0_i32_1 = arith.constant 0 : i32
    return %c0_i32, %c0_i32_0 : i32, i32
  }
  func.func @transform_4(%arg0: i32) -> (i32, i32, i32) {
    %c0_i32 = arith.constant 0 : i32
    %c0_i32_0 = arith.constant 0 : i32
    %c0_i32_1 = arith.constant 0 : i32
    %c0_i32_2 = arith.constant 0 : i32
    return %c0_i32, %c0_i32_0, %c0_i32_1 : i32, i32, i32
  }
}

</mosaic_0001>

<llo_original>
// kernel: tpu_custom_call.1
$region0: #{tpu_custom_call.1}
  #allocation0 [shape = 'u32[]', space=smem, size = 0x4, offset = 0x4, fixed_abs, tag = 'smem constant byte address 0x4 - core index']
  #allocation1 [shape = 'u32[144,128]{1,0:T(1,128)}', space=vmem, size = 0x12000, scoped, tag = 'internal scratch']
  #allocation2 [shape = 'f32[2,24,256]{2,1,0:T(8,128)}', space=vmem, size = 0xc000, scoped, tag = 'scratch operand']
  %s0 = inlined_call_operand.vmem [shape: f32[2,100,256], index: 0, kind: input, shape index: {}]
  %s1 = inlined_call_operand.vmem [shape: f32[24,100], index: 1, kind: input, shape index: {}]
  %s2 = inlined_call_operand.vmem [shape: f32[24,1], index: 2, kind: input, shape index: {}]
  %s3 = inlined_call_operand.vmem [shape: f32[24,1], index: 3, kind: input, shape index: {}]
  %s4 = inlined_call_operand.hbm [shape: f32[2,24,256], index: 4, kind: output, shape index: {}]
  %s5 = sld [smem:[#allocation0]]
  $region26: #{tpu_custom_call.1} parent=0
    _
  %s7 = ssub.s32 1, %s5
  %s8 = scalar_select 0, %s7, %s5
  $region1: #{tpu_custom_call.1} parent=0
    #allocation3 [shape = 'u8[49152]{0}', space=vmem, size = 0xc000, scoped, tag = 'output window, operand 0, single buffered']
    #allocation4 [shape = 's32[1]{0}', space=sflag, size = 0x4, scoped, tag = 'scoped memory for tpu_custom_call.1']
    %9 = vsyncpa [#allocation4], 0
    // Predicated region
    $region2: #{tpu_custom_call.1} parent=1 // pred_check
      _
    $region3: #{tpu_custom_call.1} parent=1 // pred_check_branch
      %11 = sbr.rel (0) target = $region5
    $region4: #{tpu_custom_call.1} parent=1 // pred_region
      _
    $region5: #{tpu_custom_call.1} parent=1 // pred_fallthru
      _
    // Predicated region
    $region6: #{tpu_custom_call.1} parent=1 // pred_check
      _
    $region7: #{tpu_custom_call.1} parent=1 // pred_check_branch
      %13 = sbr.rel (0) target = $region9
    $region8: #{tpu_custom_call.1} parent=1 // pred_region
      _
    $region9: #{tpu_custom_call.1} parent=1 // pred_fallthru
      _
    // Predicated region
    $region10: #{tpu_custom_call.1} parent=1 // pred_check
      _
    $region11: #{tpu_custom_call.1} parent=1 // pred_check_branch
      %15 = sbr.rel (0) target = $region13
    $region12: #{tpu_custom_call.1} parent=1 // pred_region
      _
    $region13: #{tpu_custom_call.1} parent=1 // pred_fallthru
      _
    // Predicated region
    $region14: #{tpu_custom_call.1} parent=1 // pred_check
      _
    $region15: #{tpu_custom_call.1} parent=1 // pred_check_branch
      %17 = sbr.rel (0) target = $region17
    $region16: #{tpu_custom_call.1} parent=1 // pred_region
      _
    $region17: #{tpu_custom_call.1} parent=1 // pred_fallthru
      _
    %v18 = vld [vmem:[%s1] sm:$0xff]
    %v19 = vld [vmem:[%s1 + $0x8] sm:$0xff]
    %v20 = vld [vmem:[%s1 + $0x10] sm:$0xff]
    %v21 = vld [vmem:[%s0] sm:$0xff]
    %v22 = vld [vmem:[%s0 + $0x8] sm:$0xff]
    %v23 = vld [vmem:[%s0 + $0x10] sm:$0xff]
    %v24 = vld [vmem:[%s0 + $0x18] sm:$0xff]
    %v25 = vld [vmem:[%s0 + $0x20] sm:$0xff]
    %v26 = vld [vmem:[%s0 + $0x28] sm:$0xff]
    %v27 = vld [vmem:[%s0 + $0x30] sm:$0xff]
    %v28 = vld [vmem:[%s0 + $0x38] sm:$0xff]
    %v29 = vld [vmem:[%s0 + $0x40] sm:$0xff]
    %v30 = vld [vmem:[%s0 + $0x48] sm:$0xff]
    %v31 = vld [vmem:[%s0 + $0x50] sm:$0xff]
    %v32 = vld [vmem:[%s0 + $0x58] sm:$0xff]
    %v33 = vld [vmem:[%s0 + $0x60] sm:$0xff]
    %v34 = vld [vmem:[%s0 + $0x68] sm:$0xff]
    %v35 = vld [vmem:[%s0 + $0x70] sm:$0xff]
    %v36 = vld [vmem:[%s0 + $0x78] sm:$0xff]
    %v37 = vld [vmem:[%s0 + $0x80] sm:$0xff]
    %v38 = vld [vmem:[%s0 + $0x88] sm:$0xff]
    %v39 = vld [vmem:[%s0 + $0x90] sm:$0xff]
    %v40 = vld [vmem:[%s0 + $0x98] sm:$0xff]
    %v41 = vld [vmem:[%s0 + $0xa0] sm:$0xff]
    %v42 = vld [vmem:[%s0 + $0xa8] sm:$0xff]
    %v43 = vld [vmem:[%s0 + $0xb0] sm:$0xff]
    %v44 = vld [vmem:[%s0 + $0xb8] sm:$0xff]
    %v45 = vld [vmem:[%s0 + $0xc0] sm:$0xf]
    %v46 = vld [vmem:[%s0 + $0xc8] sm:$0xf]
    %vm47 = vcmask 818176
    %v49 = vsel %vm47, %v18, 0
    %v52 = vsel %vm47, %v19, 0
    %v55 = vsel %vm47, %v20, 0
    %vm57 = vcmask 1043456
    %v59 = vsel %vm57, %v45, 0
    %v62 = vsel %vm57, %v46, 0
    %64 = vmatprep.subr.mxu0 %v22
    %65 = vmatpush1.msra.mxu0 %v21
    %66 = vmatprep.subr.mxu0 %v24
    %67 = vmatpush1.msra.mxu0 %v23
    %68 = vmatprep.subr.mxu0 %v26
    %69 = vmatpush1.msra.mxu0 %v25
    %70 = vmatprep.subr.mxu0 %v28
    %71 = vmatpush1.msra.mxu0 %v27
    %72 = vmatprep.subr.mxu0 %v30
    %73 = vmatpush1.msra.mxu0 %v29
    %74 = vmatprep.subr.mxu0 %v32
    %75 = vmatpush1.msra.mxu0 %v31
    %76 = vmatprep.subr.mxu0 %v34
    %77 = vmatpush1.msra.mxu0 %v33
    %78 = vmatprep.subr.mxu0 %v36
    %79 = vmatpush1.msra.mxu0 %v35
    %80 = vmatprep.subr.mxu0 %v38
    %81 = vmatpush1.msra.mxu0 %v37
    %82 = vmatprep.subr.mxu0 %v40
    %83 = vmatpush1.msra.mxu0 %v39
    %84 = vmatprep.subr.mxu0 %v42
    %85 = vmatpush1.msra.mxu0 %v41
    %86 = vmatprep.subr.mxu0 %v44
    %87 = vmatpush1.msra.mxu0 %v43
    %88 = vmatprep.subr.mxu0 %v62
    %89 = vmatpush1.msra.mxu0 %v59
    %90 = vmatprep.subr.mxu0 0.0
    %91 = vmatpush1.msra.mxu0 0.0
    %92 = vmatprep.subr.mxu0 0.0
    %93 = vmatpush1.msra.mxu0 0.0
    %94 = vmatprep.subr.mxu0 0.0
    %95 = vmatpush1.msra.mxu0 0.0
    %96 = vmatprep.subr.mxu0 0.0
    %97 = vmatpush1.msra.mxu0 0.0
    %98 = vmatprep.subr.mxu0 0.0
    %99 = vmatpush1.msra.mxu0 0.0
    %100 = vmatprep.subr.mxu0 0.0
    %101 = vmatpush1.msra.mxu0 0.0
    %102 = vmatprep.subr.mxu0 0.0
    %103 = vmatpush1.msra.mxu0 0.0
    %104 = vmatprep.subr.mxu0 0.0
    %105 = vmatpush1.msra.mxu0 0.0
    %106 = vmatprep.subr.mxu0 0.0
    %107 = vmatpush1.msra.mxu0 0.0
    %108 = vmatprep.subr.mxu0 0.0
    %109 = vmatpush1.msra.mxu0 0.0
    %110 = vmatprep.subr.mxu0 0.0
    %111 = vmatpush1.msra.mxu0 0.0
    %112 = vmatprep.subr.mxu0 0.0
    %113 = vmatpush1.msra.mxu0 0.0
    %114 = vmatprep.subr.mxu0 0.0
    %115 = vmatpush1.msra.mxu0 0.0
    %116 = vmatprep.subr.mxu0 0.0
    %117 = vmatpush1.msra.mxu0 0.0
    %118 = vmatprep.subr.mxu0 0.0
    %119 = vmatpush1.msra.mxu0 0.0
    %120 = vmatprep.subr.mxu0 0.0
    %121 = vmatpush1.msra.mxu0 0.0
    %122 = vmatprep.subr.mxu0 0.0
    %123 = vmatpush1.msra.mxu0 0.0
    %124 = vmatprep.subr.mxu0 0.0
    %125 = vmatpush1.msra.mxu0 0.0
    %126 = vmatprep.subr.mxu0 0.0
    %127 = vmatpush1.msra.mxu0 0.0
    %128 = vmatprep.mubr.f32.mxu0 0.0
    %129 = vmatmul.mubr.f32.gmra.mrb[0].mxu0 %v49
    %v130 = vpop.f32.mrb[0].mxu0
    %v131 = vadd.f32 0.0, %v130
    %v132 = vpop.f32.mrb[0].mxu0
    %v133 = vadd.f32 0.0, %v132
    %134 = vmatprep.mubr.f32.mxu0 0.0
    %135 = vmatmul.mubr.f32.gmra.mrb[0].mxu0 %v52
    %v136 = vpop.f32.mrb[0].mxu0
    %v137 = vadd.f32 0.0, %v136
    %v138 = vpop.f32.mrb[0].mxu0
    %v139 = vadd.f32 0.0, %v138
    %140 = vmatprep.mubr.f32.mxu0 0.0
    %141 = vmatmul.mubr.f32.gmra.mrb[0].mxu0 %v55
    %v142 = vpop.f32.mrb[0].mxu0
    %v143 = vadd.f32 0.0, %v142
    %v144 = vpop.f32.mrb[0].mxu0
    %v145 = vadd.f32 0.0, %v144
    %146 = vdwg.mxu0
    %147 = vst [vmem:[#allocation2] sm:$0xff] %v131
    %148 = vst [vmem:[#allocation2 + $0x8] sm:$0xff] %v133
    %149 = vst [vmem:[#allocation2 + $0x10] sm:$0xff] %v137
    %150 = vst [vmem:[#allocation2 + $0x18] sm:$0xff] %v139
    %151 = vst [vmem:[#allocation2 + $0x20] sm:$0xff] %v143
    %152 = vst [vmem:[#allocation2 + $0x28] sm:$0xff] %v145
    %v153 = vadd.f32 %v131, %v133
    %154 = vadd.xlane.f32.xlu0 %v153
    %v155 = vpop.xlane.xlu0 %154
    %v156 = vadd.f32 %v137, %v139
    %157 = vadd.xlane.f32.xlu0 %v156
    %v158 = vpop.xlane.xlu0 %157
    %v159 = vadd.f32 %v143, %v145
    %160 = vadd.xlane.f32.xlu0 %v159
    %v161 = vpop.xlane.xlu0 %160
    %v162 = vadd.f32 %v155, 0.0
    %v163 = vadd.f32 %v158, 0.0
    %v164 = vadd.f32 %v161, 0.0
    %v165 = vmul.f32 %v131, %v131
    %v166 = vmul.f32 %v133, %v133
    %v167 = vmul.f32 %v137, %v137
    %v168 = vmul.f32 %v139, %v139
    %v169 = vmul.f32 %v143, %v143
    %v170 = vmul.f32 %v145, %v145
    %v171 = vadd.f32 %v165, %v166
    %172 = vadd.xlane.f32.xlu0 %v171
    %v173 = vpop.xlane.xlu0 %172
    %v174 = vadd.f32 %v167, %v168
    %175 = vadd.xlane.f32.xlu0 %v174
    %v176 = vpop.xlane.xlu0 %175
    %v177 = vadd.f32 %v169, %v170
    %178 = vadd.xlane.f32.xlu0 %v177
    %v179 = vpop.xlane.xlu0 %178
    %v180 = vadd.f32 %v173, 0.0
    %v181 = vadd.f32 %v176, 0.0
    %v182 = vadd.f32 %v179, 0.0
    %v183 = vld [vmem:[%s1] sm:$0xff]
    %v184 = vld [vmem:[%s1 + $0x8] sm:$0xff]
    %v185 = vld [vmem:[%s1 + $0x10] sm:$0xff]
    %s186 = scalar_lea.vmem %s0, 208
    %v187 = vld [vmem:[%s186] sm:$0xff]
    %v188 = vld [vmem:[%s186 + $0x8] sm:$0xff]
    %v189 = vld [vmem:[%s186 + $0x10] sm:$0xff]
    %v190 = vld [vmem:[%s186 + $0x18] sm:$0xff]
    %v191 = vld [vmem:[%s186 + $0x20] sm:$0xff]
    %v192 = vld [vmem:[%s186 + $0x28] sm:$0xff]
    %v193 = vld [vmem:[%s186 + $0x30] sm:$0xff]
    %v194 = vld [vmem:[%s186 + $0x38] sm:$0xff]
    %v195 = vld [vmem:[%s186 + $0x40] sm:$0xff]
    %v196 = vld [vmem:[%s186 + $0x48] sm:$0xff]
    %v197 = vld [vmem:[%s186 + $0x50] sm:$0xff]
    %v198 = vld [vmem:[%s186 + $0x58] sm:$0xff]
    %v199 = vld [vmem:[%s186 + $0x60] sm:$0xff]
    %v200 = vld [vmem:[%s186 + $0x68] sm:$0xff]
    %v201 = vld [vmem:[%s186 + $0x70] sm:$0xff]
    %v202 = vld [vmem:[%s186 + $0x78] sm:$0xff]
    %v203 = vld [vmem:[%s186 + $0x80] sm:$0xff]
    %v204 = vld [vmem:[%s186 + $0x88] sm:$0xff]
    %v205 = vld [vmem:[%s186 + $0x90] sm:$0xff]
    %v206 = vld [vmem:[%s186 + $0x98] sm:$0xff]
    %v207 = vld [vmem:[%s186 + $0xa0] sm:$0xff]
    %v208 = vld [vmem:[%s186 + $0xa8] sm:$0xff]
    %v209 = vld [vmem:[%s186 + $0xb0] sm:$0xff]
    %v210 = vld [vmem:[%s186 + $0xb8] sm:$0xff]
    %v211 = vld [vmem:[%s186 + $0xc0] sm:$0xf]
    %v212 = vld [vmem:[%s186 + $0xc8] sm:$0xf]
    %v214 = vsel %vm47, %v183, 0
    %v217 = vsel %vm47, %v184, 0
    %v220 = vsel %vm47, %v185, 0
    %v223 = vsel %vm57, %v211, 0
    %v226 = vsel %vm57, %v212, 0
    %228 = vmatprep.subr.mxu0 %v188
    %229 = vmatpush1.msra.mxu0 %v187
    %230 = vmatprep.subr.mxu0 %v190
    %231 = vmatpush1.msra.mxu0 %v189
    %232 = vmatprep.subr.mxu0 %v192
    %233 = vmatpush1.msra.mxu0 %v191
    %234 = vmatprep.subr.mxu0 %v194
    %235 = vmatpush1.msra.mxu0 %v193
    %236 = vmatprep.subr.mxu0 %v196
    %237 = vmatpush1.msra.mxu0 %v195
    %238 = vmatprep.subr.mxu0 %v198
    %239 = vmatpush1.msra.mxu0 %v197
    %240 = vmatprep.subr.mxu0 %v200
    %241 = vmatpush1.msra.mxu0 %v199
    %242 = vmatprep.subr.mxu0 %v202
    %243 = vmatpush1.msra.mxu0 %v201
    %244 = vmatprep.subr.mxu0 %v204
    %245 = vmatpush1.msra.mxu0 %v203
    %246 = vmatprep.subr.mxu0 %v206
    %247 = vmatpush1.msra.mxu0 %v205
    %248 = vmatprep.subr.mxu0 %v208
    %249 = vmatpush1.msra.mxu0 %v207
    %250 = vmatprep.subr.mxu0 %v210
    %251 = vmatpush1.msra.mxu0 %v209
    %252 = vmatprep.subr.mxu0 %v226
    %253 = vmatpush1.msra.mxu0 %v223
    %254 = vmatprep.subr.mxu0 0.0
    %255 = vmatpush1.msra.mxu0 0.0
    %256 = vmatprep.subr.mxu0 0.0
    %257 = vmatpush1.msra.mxu0 0.0
    %258 = vmatprep.subr.mxu0 0.0
    %259 = vmatpush1.msra.mxu0 0.0
    %260 = vmatprep.subr.mxu0 0.0
    %261 = vmatpush1.msra.mxu0 0.0
    %262 = vmatprep.subr.mxu0 0.0
    %263 = vmatpush1.msra.mxu0 0.0
    %264 = vmatprep.subr.mxu0 0.0
    %265 = vmatpush1.msra.mxu0 0.0
    %266 = vmatprep.subr.mxu0 0.0
    %267 = vmatpush1.msra.mxu0 0.0
    %268 = vmatprep.subr.mxu0 0.0
    %269 = vmatpush1.msra.mxu0 0.0
    %270 = vmatprep.subr.mxu0 0.0
    %271 = vmatpush1.msra.mxu0 0.0
    %272 = vmatprep.subr.mxu0 0.0
    %273 = vmatpush1.msra.mxu0 0.0
    %274 = vmatprep.subr.mxu0 0.0
    %275 = vmatpush1.msra.mxu0 0.0
    %276 = vmatprep.subr.mxu0 0.0
    %277 = vmatpush1.msra.mxu0 0.0
    %278 = vmatprep.subr.mxu0 0.0
    %279 = vmatpush1.msra.mxu0 0.0
    %280 = vmatprep.subr.mxu0 0.0
    %281 = vmatpush1.msra.mxu0 0.0
    %282 = vmatprep.subr.mxu0 0.0
    %283 = vmatpush1.msra.mxu0 0.0
    %284 = vmatprep.subr.mxu0 0.0
    %285 = vmatpush1.msra.mxu0 0.0
    %286 = vmatprep.subr.mxu0 0.0
    %287 = vmatpush1.msra.mxu0 0.0
    %288 = vmatprep.subr.mxu0 0.0
    %289 = vmatpush1.msra.mxu0 0.0
    %290 = vmatprep.subr.mxu0 0.0
    %291 = vmatpush1.msra.mxu0 0.0
    %292 = vmatprep.mubr.f32.mxu0 0.0
    %293 = vmatmul.mubr.f32.gmra.mrb[0].mxu0 %v214
    %v294 = vpop.f32.mrb[0].mxu0
    %v295 = vadd.f32 0.0, %v294
    %v296 = vpop.f32.mrb[0].mxu0
    %v297 = vadd.f32 0.0, %v296
    %298 = vmatprep.mubr.f32.mxu0 0.0
    %299 = vmatmul.mubr.f32.gmra.mrb[0].mxu0 %v217
    %v300 = vpop.f32.mrb[0].mxu0
    %v301 = vadd.f32 0.0, %v300
    %v302 = vpop.f32.mrb[0].mxu0
    %v303 = vadd.f32 0.0, %v302
    %304 = vmatprep.mubr.f32.mxu0 0.0
    %305 = vmatmul.mubr.f32.gmra.mrb[0].mxu0 %v220
    %v306 = vpop.f32.mrb[0].mxu0
    %v307 = vadd.f32 0.0, %v306
    %v308 = vpop.f32.mrb[0].mxu0
    %v309 = vadd.f32 0.0, %v308
    %310 = vdwg.mxu0
    %s311 = scalar_lea.vmem [#allocation2], 48
    %312 = vst [vmem:[%s311] sm:$0xff] %v295
    %313 = vst [vmem:[%s311 + $0x8] sm:$0xff] %v297
    %314 = vst [vmem:[%s311 + $0x10] sm:$0xff] %v301
    %315 = vst [vmem:[%s311 + $0x18] sm:$0xff] %v303
    %316 = vst [vmem:[%s311 + $0x20] sm:$0xff] %v307
    %317 = vst [vmem:[%s311 + $0x28] sm:$0xff] %v309
    %v318 = vadd.f32 %v295, %v297
    %319 = vadd.xlane.f32.xlu0 %v318
    %v320 = vpop.xlane.xlu0 %319
    %v321 = vadd.f32 %v301, %v303
    %322 = vadd.xlane.f32.xlu0 %v321
    %v323 = vpop.xlane.xlu0 %322
    %v324 = vadd.f32 %v307, %v309
    %325 = vadd.xlane.f32.xlu0 %v324
    %v326 = vpop.xlane.xlu0 %325
    %v327 = vadd.f32 %v162, %v320
    %v328 = vadd.f32 %v163, %v323
    %v329 = vadd.f32 %v164, %v326
    %v330 = vmul.f32 %v295, %v295
    %v331 = vmul.f32 %v297, %v297
    %v332 = vmul.f32 %v301, %v301
    %v333 = vmul.f32 %v303, %v303
    %v334 = vmul.f32 %v307, %v307
    %v335 = vmul.f32 %v309, %v309
    %v336 = vadd.f32 %v330, %v331
    %337 = vadd.xlane.f32.xlu0 %v336
    %v338 = vpop.xlane.xlu0 %337
    %v339 = vadd.f32 %v332, %v333
    %340 = vadd.xlane.f32.xlu0 %v339
    %v341 = vpop.xlane.xlu0 %340
    %v342 = vadd.f32 %v334, %v335
    %343 = vadd.xlane.f32.xlu0 %v342
    %v344 = vpop.xlane.xlu0 %343
    %v345 = vadd.f32 %v180, %v338
    %v346 = vadd.f32 %v181, %v341
    %v347 = vadd.f32 %v182, %v344
    %v348 = vrcp.pop 512.0
    %v349 = vmul.f32 %v327, %v348
    %v350 = vmul.f32 %v328, %v348
    %v351 = vmul.f32 %v329, %v348
    %v352 = vmul.f32 %v345, %v348
    %v353 = vmul.f32 %v346, %v348
    %v354 = vmul.f32 %v347, %v348
    %v355 = vmul.f32 %v349, %v349
    %v356 = vmul.f32 %v350, %v350
    %v357 = vmul.f32 %v351, %v351
    %v358 = vsub.f32 %v352, %v355
    %v359 = vsub.f32 %v353, %v356
    %v360 = vsub.f32 %v354, %v357
    %v361 = vmax.f32 %v358, 0.0
    %v362 = vmax.f32 %v359, 0.0
    %v363 = vmax.f32 %v360, 0.0
    %v364 = vadd.f32 %v361, 1e-05
    %v365 = vadd.f32 %v362, 1e-05
    %v366 = vadd.f32 %v363, 1e-05
    %v367 = vrsqrt.pop %v364
    %v368 = vrsqrt.pop %v365
    %v369 = vrsqrt.pop %v366
    %v370 = vld [vmem:[%s2] sm:$0xff]
    %v371 = vld [vmem:[%s2 + $0x8] sm:$0xff]
    %v372 = vld [vmem:[%s2 + $0x10] sm:$0xff]
    %v373 = vmul.f32 %v370, %v367
    %v374 = vmul.f32 %v371, %v368
    %v375 = vmul.f32 %v372, %v369
    %v376 = vld [vmem:[%s3] sm:$0xff]
    %v377 = vld [vmem:[%s3 + $0x8] sm:$0xff]
    %v378 = vld [vmem:[%s3 + $0x10] sm:$0xff]
    %v379 = vmul.f32 %v349, %v373
    %v380 = vmul.f32 %v350, %v374
    %v381 = vmul.f32 %v351, %v375
    %v382 = vsub.f32 %v376, %v379
    %v383 = vsub.f32 %v377, %v380
    %v384 = vsub.f32 %v378, %v381
    %v385 = vld [vmem:[#allocation2] sm:$0xff]
    %v386 = vld [vmem:[#allocation2 + $0x8] sm:$0xff]
    %v387 = vld [vmem:[#allocation2 + $0x10] sm:$0xff]
    %v388 = vld [vmem:[#allocation2 + $0x18] sm:$0xff]
    %v389 = vld [vmem:[#allocation2 + $0x20] sm:$0xff]
    %v390 = vld [vmem:[#allocation2 + $0x28] sm:$0xff]
    %392 = vset.pattern.permute.xlu0 0
    %393 = vperm.xlu0 %392, %v373
    %v394 = vpop.permute.xlu0 %393
    %397 = vset.pattern.permute.xlu0 0
    %398 = vperm.xlu0 %397, %v374
    %v399 = vpop.permute.xlu0 %398
    %402 = vset.pattern.permute.xlu0 0
    %403 = vperm.xlu0 %402, %v375
    %v404 = vpop.permute.xlu0 %403
    %v406 = vmul.f32 %v385, %v394
    %v407 = vmul.f32 %v386, %v394
    %v408 = vmul.f32 %v387, %v399
    %v409 = vmul.f32 %v388, %v399
    %v410 = vmul.f32 %v389, %v404
    %v411 = vmul.f32 %v390, %v404
    %413 = vset.pattern.permute.xlu0 0
    %414 = vperm.xlu0 %413, %v382
    %v415 = vpop.permute.xlu0 %414
    %418 = vset.pattern.permute.xlu0 0
    %419 = vperm.xlu0 %418, %v383
    %v420 = vpop.permute.xlu0 %419
    %423 = vset.pattern.permute.xlu0 0
    %424 = vperm.xlu0 %423, %v384
    %v425 = vpop.permute.xlu0 %424
    %v427 = vadd.f32 %v406, %v415
    %v428 = vadd.f32 %v407, %v415
    %v429 = vadd.f32 %v408, %v420
    %v430 = vadd.f32 %v409, %v420
    %v431 = vadd.f32 %v410, %v425
    %v432 = vadd.f32 %v411, %v425
    %v433 = vmax.f32 %v427, 0.0
    %v434 = vmax.f32 %v428, 0.0
    %v435 = vmax.f32 %v429, 0.0
    %v436 = vmax.f32 %v430, 0.0
    %v437 = vmax.f32 %v431, 0.0
    %v438 = vmax.f32 %v432, 0.0
    %439 = vst [vmem:[#allocation3] sm:$0xff] %v433
    %440 = vst [vmem:[#allocation3 + $0x8] sm:$0xff] %v434
    %441 = vst [vmem:[#allocation3 + $0x10] sm:$0xff] %v435
    %442 = vst [vmem:[#allocation3 + $0x18] sm:$0xff] %v436
    %443 = vst [vmem:[#allocation3 + $0x20] sm:$0xff] %v437
    %444 = vst [vmem:[#allocation3 + $0x28] sm:$0xff] %v438
    %v445 = vld [vmem:[%s311] sm:$0xff]
    %v446 = vld [vmem:[%s311 + $0x8] sm:$0xff]
    %v447 = vld [vmem:[%s311 + $0x10] sm:$0xff]
    %v448 = vld [vmem:[%s311 + $0x18] sm:$0xff]
    %v449 = vld [vmem:[%s311 + $0x20] sm:$0xff]
    %v450 = vld [vmem:[%s311 + $0x28] sm:$0xff]
    %v451 = vmul.f32 %v445, %v394
    %v452 = vmul.f32 %v446, %v394
    %v453 = vmul.f32 %v447, %v399
    %v454 = vmul.f32 %v448, %v399
    %v455 = vmul.f32 %v449, %v404
    %v456 = vmul.f32 %v450, %v404
    %v457 = vadd.f32 %v451, %v415
    %v458 = vadd.f32 %v452, %v415
    %v459 = vadd.f32 %v453, %v420
    %v460 = vadd.f32 %v454, %v420
    %v461 = vadd.f32 %v455, %v425
    %v462 = vadd.f32 %v456, %v425
    %v463 = vmax.f32 %v457, 0.0
    %v464 = vmax.f32 %v458, 0.0
    %v465 = vmax.f32 %v459, 0.0
    %v466 = vmax.f32 %v460, 0.0
    %v467 = vmax.f32 %v461, 0.0
    %v468 = vmax.f32 %v462, 0.0
    %s469 = scalar_lea.vmem [#allocation3], 48
    %470 = vst [vmem:[%s469] sm:$0xff] %v463
    %471 = vst [vmem:[%s469 + $0x8] sm:$0xff] %v464
    %472 = vst [vmem:[%s469 + $0x10] sm:$0xff] %v465
    %473 = vst [vmem:[%s469 + $0x18] sm:$0xff] %v466
    %474 = vst [vmem:[%s469 + $0x20] sm:$0xff] %v467
    %475 = vst [vmem:[%s469 + $0x28] sm:$0xff] %v468
    // Predicated region
    $region18: #{tpu_custom_call.1} parent=1 // pred_check
      _
    $region19: #{tpu_custom_call.1} parent=1 // pred_check_branch
      %477 = sbr.rel (0) target = $region21
    $region20: #{tpu_custom_call.1} parent=1 // pred_region
      %s479 = ssub.s32 1536, 1536
      %480 = vsyncadd [#allocation4], %s479
      %s481 = sshll.u32 [#allocation3], 4
      %s482 = int_to_ptr.vmem [resolvable:$true] %s481
      %487 = dma.vmem_to_hbm [thread:$0]  %s482, 1536, %s4, [#allocation4], 256, 256, 16
    $region21: #{tpu_custom_call.1} parent=1 // pred_fallthru
      _
    // Predicated region
    $region22: #{tpu_custom_call.1} parent=1 // pred_check
      _
    $region23: #{tpu_custom_call.1} parent=1 // pred_check_branch
      %489 = sbr.rel (0) target = $region25
    $region24: #{tpu_custom_call.1} parent=1 // pred_region
      %490 = dma.done [#allocation4], 1536
    $region25: #{tpu_custom_call.1} parent=1 // pred_fallthru
      _
    %491 = vsyncpa [#allocation4], 1

</llo_original>
